<compile_context>
chip_gen: v7x
topology: tpu7x:2x2x1
jax: 0.10.0
libtpu: 0.0.40
codegen_flags: <defaults>
</compile_context>

<pallas_src>
import functools

import jax
import jax.numpy as jnp
from jax.experimental import pallas as pl
from jax.experimental.pallas import tpu as pltpu

WARMUP = 80          # self.warmpup in the torch module
EPS_KEY = 0.01       # epsilon subtracted from each key_loss before clamping
EPS0 = 0.0           # epsilon added inside loss_value (always 0.0 in the module)
_TILE_S_CAP = 2048   # default cap for the inner sample-axis tile (lane dim)


def _round_up(x, m):
    return ((x + m - 1) // m) * m


def _round_down(x, m):
    return (x // m) * m


def _cdiv(a, b):
    return (a + b - 1) // b


def _vmem_capacity_bytes():
    # Trace-time hardware query; conservative fallback (v7x-class 64 MiB/TC).
    try:
        info = pltpu.get_tpu_info()
        cap = getattr(info, "vmem_capacity_bytes", None)
        if cap:
            return int(cap)
    except Exception:
        pass
    return 64 * 1024 * 1024


def _sample_loss_kernel(step_ref, loss_ref, succ_ref, out_ref, tot_ref, true_ref):
    # step_ref: (1,) int32 SMEM (scalar prefetch) -- current iter_step
    # loss_ref: (TILE_NC, TILE_S) f32 VMEM        -- lossTensor chunk
    # succ_ref: (TILE_NC, TILE_S) int8 VMEM       -- lcSuccesses (0/1) chunk
    # out_ref : (1, 8, 128) f32 VMEM              -- lane-dense per-NC-tile partial sum
    # tot_ref / true_ref: (TILE_NC, 1) f32 VMEM   -- running sums across the S axis
    j = pl.program_id(1)

    @pl.when(j == 0)
    def _():
        tot_ref[...] = jnp.zeros_like(tot_ref)
        true_ref[...] = jnp.zeros_like(true_ref)

    loss = loss_ref[...]
    masked = jnp.where(succ_ref[...] != 0, loss, 0.0)          # avoid int8->f32 convert
    tot_ref[...] += jnp.sum(loss, axis=-1, keepdims=True)      # (TILE_NC, 1)
    true_ref[...] += jnp.sum(masked, axis=-1, keepdims=True)   # (TILE_NC, 1)

    @pl.when(j == pl.num_programs(1) - 1)
    def _():
        total = tot_ref[...]
        true_sum = true_ref[...]

        # branch guards from the torch code: lossTensor.sum()!=0 and true_val.sum()!=0
        valid = jnp.logical_and(total != 0.0, true_sum != 0.0)

        safe_total = jnp.where(total == 0.0, 1.0, total)
        ratio = true_sum * pl.reciprocal(safe_total, approx=False)
        log_ratio = jnp.log(jnp.where(valid, ratio, 1.0)) + EPS0   # = loss_value

        # warmup: min_val = detach(loss_value) -> loss_ = loss_value^2
        # else:   min_val = -1                 -> loss_ = -loss_value
        # TODO(synk): forward-only kernel; the torch detach() only matters for grads --
        # differentiating through this pallas_call would need a custom_vjp.
        warm = step_ref[0] < WARMUP
        loss_ = jnp.where(warm, log_ratio * log_ratio, -log_ratio)

        key_loss = jnp.where(valid, loss_, 0.0)
        key_loss = jnp.maximum(key_loss - EPS_KEY, 0.0)            # max(key_loss - eps, 0)

        # One scalar partial per NC tile, broadcast over a full (8,128) vreg so the
        # store is an unmasked lane-dense vst; the wrapper reads element [tile, 0, 0].
        out_ref[...] = jnp.broadcast_to(jnp.sum(key_loss), out_ref.shape)


@functools.partial(jax.jit, static_argnames=("max_tile_nc", "max_tile_s"))
def sample_loss_forward(loss_tensor, lc_successes, iter_step, *,
                        max_tile_nc=None, max_tile_s=None):
    """loss_tensor, lc_successes: [nconstr, sampleSize]; iter_step: (1,) int32."""
    nc, s = loss_tensor.shape

    # --- VMEM-aware tile sizing ------------------------------------------------
    # Use half the physical VMEM (capped at 64 MiB): 32 MiB on v7x (64 MiB/TC),
    # 64 MiB on v5e/v6e (128 MiB/TC). 3/4 of that feeds the double-buffered inputs
    # plus the two (tile_nc, 1) f32 scratches.
    vmem_cap = _vmem_capacity_bytes()
    vmem_limit = min(vmem_cap // 2, 64 * 1024 * 1024)
    input_budget = (3 * vmem_limit) // 4

    # Sample axis: pad to a lane multiple; split into an inner grid axis if huge.
    s_cap = _TILE_S_CAP if max_tile_s is None else max(128, _round_up(max_tile_s, 128))
    s_aligned = _round_up(s, 128)
    tile_s = min(s_aligned, s_cap)
    s_pad = _round_up(s, tile_s)

    # Constraint axis: fill the VMEM budget (int8 rows pack 32/sublane-tile -> x32),
    # but keep >= 2 tiles when possible so v7x's two TensorCores both get work.
    row_bytes = 2 * (4 + 1) * tile_s + 2 * 512   # 2 bufs x (f32 + int8) + 2 f32(,1) scratch
    budget_tile = max(32, _round_down(input_budget // row_bytes, 32))
    nc_aligned = _round_up(nc, 32)
    mc_cap = _round_up(_cdiv(nc_aligned, 2), 32) if nc_aligned >= 64 else nc_aligned
    tile_nc = max(32, min(budget_tile, mc_cap))
    if max_tile_nc is not None:
        tile_nc = max(32, min(tile_nc, _round_up(max_tile_nc, 32)))
    nc_pad = _round_up(nc, tile_nc)

    # Padded rows/cols are zero: zero loss -> contributes 0 to both sums; a fully
    # padded row has total == 0 -> invalid -> contributes exactly 0 to the loss.
    if (nc_pad, s_pad) != (nc, s):
        pad = ((0, nc_pad - nc), (0, s_pad - s))
        loss_tensor = jnp.pad(loss_tensor, pad)
        lc_successes = jnp.pad(lc_successes, pad)

    loss_tensor = loss_tensor.astype(jnp.float32)
    succ_i8 = lc_successes.astype(jnp.int8)       # 0/1 mask, 1 byte/elem in HBM
    iter_step = iter_step.astype(jnp.int32)

    num_nc_tiles = nc_pad // tile_nc
    num_s_tiles = s_pad // tile_s

    grid_spec = pltpu.PrefetchScalarGridSpec(
        num_scalar_prefetch=1,                                       # iter_step -> SMEM
        grid=(num_nc_tiles, num_s_tiles),
        in_specs=[
            pl.BlockSpec((tile_nc, tile_s), lambda i, j, step: (i, j)),   # lossTensor
            pl.BlockSpec((tile_nc, tile_s), lambda i, j, step: (i, j)),   # lcSuccesses
        ],
        out_specs=pl.BlockSpec((1, 8, 128), lambda i, j, step: (i, 0, 0)),
        scratch_shapes=[
            pltpu.VMEM((tile_nc, 1), jnp.float32),   # running sum(loss)
            pltpu.VMEM((tile_nc, 1), jnp.float32),   # running sum(loss * mask)
        ],
    )
    partials = pl.pallas_call(
        _sample_loss_kernel,
        out_shape=jax.ShapeDtypeStruct((num_nc_tiles, 8, 128), jnp.float32),
        grid_spec=grid_spec,
        compiler_params=pltpu.CompilerParams(
            # NC tiles are independent -> megacore-shardable on v7x; S axis is a
            # reduction carried in scratch -> "arbitrary".
            dimension_semantics=("parallel", "arbitrary"),
            vmem_limit_bytes=int(vmem_limit),
        ),
    )(iter_step, loss_tensor, succ_i8)

    # lmbd_loss = sum over constraint keys (each NC tile contributed one partial sum).
    return partials[:, 0, 0].sum()


def reference_forward(loss_tensor, lc_successes, iter_step):
    total = loss_tensor.sum(axis=-1)
    true_sum = (loss_tensor * lc_successes).sum(axis=-1)
    valid = (total != 0.0) & (true_sum != 0.0)
    ratio = true_sum / jnp.where(total == 0.0, 1.0, total)
    log_ratio = jnp.log(jnp.where(valid, ratio, 1.0)) + EPS0
    loss_ = jnp.where(int(iter_step[0]) < WARMUP, log_ratio * log_ratio, -log_ratio)
    key_loss = jnp.maximum(jnp.where(valid, loss_, 0.0) - EPS_KEY, 0.0)
    return key_loss.sum()


if __name__ == "__main__":
    NC, S = 100, 200   # nconstr logical constraints, sampleSize (not lane-aligned on purpose)

    # Deterministic parameter init matching reset_parameters(): lmbd = zeros(nconstr).
    # (lmbd is held by the module but does not enter this forward's loss value.)
    lmbd = jnp.zeros((NC,), jnp.float32)
    # TODO(synk): DataNodeBuilder / graph traversal (calculateLcLoss) has no Pallas
    # equivalent; its numeric outputs (lossTensor, lcSuccesses) are synthesized here.

    key = jax.random.PRNGKey(0)
    k1, k2 = jax.random.split(key)
    loss_tensor = jax.random.uniform(k1, (NC, S), jnp.float32, 1e-3, 1.0)
    lc_successes = (jax.random.uniform(k2, (NC, S)) > 0.5).astype(jnp.float32)
    # Exercise the "loss_ = 0" guards: one all-zero loss row, one all-zero mask row.
    loss_tensor = loss_tensor.at[3].set(0.0)
    lc_successes = lc_successes.at[7].set(0.0)

    # Config 1: auto (VMEM-budget) tiles, single S step.
    # Config 2: forced small tiles -> multi-step NC grid AND multi-step S reduction.
    configs = ({}, {"max_tile_nc": 32, "max_tile_s": 128})

    for step_val in (1, 100):   # warmup (squared-log) branch and post-warmup branch
        for tile_kwargs in configs:
            iter_step = jnp.array([step_val], jnp.int32)
            out = sample_loss_forward(loss_tensor, lc_successes, iter_step,
                                      **tile_kwargs)
            out = jax.block_until_ready(out)
            ref = reference_forward(loss_tensor, lc_successes, iter_step)
            assert jnp.allclose(out, ref, rtol=1e-5, atol=1e-5), (
                step_val, tile_kwargs, out, ref)

    print("KERNEL_OK")
</pallas_src>

<mosaic_0001>
module attributes {stable_mosaic.version = 11 : i64} {
  func.func @_sample_loss_kernel(%arg0: i32, %arg1: i32, %arg2: memref<1xi32, #tpu.memory_space<smem>>, %arg3: memref<64x256xf32, #tpu.memory_space<vmem>>, %arg4: memref<64x256xi8, #tpu.memory_space<vmem>>, %arg5: memref<1x8x128xf32, #tpu.memory_space<vmem>>, %arg6: memref<64x1xf32, #tpu.memory_space<vmem>>, %arg7: memref<64x1xf32, #tpu.memory_space<vmem>>) attributes {dimension_semantics = [#tpu.dimension_semantics<parallel>, #tpu.dimension_semantics<arbitrary>], iteration_bounds = array<i64: 2, 1>, scalar_prefetch = 1 : i64, scratch_operands = 2 : i64, tpu.core_type = #tpu.core_type<tc>, window_params = [{transform_indices = @transform_0, window_bounds = array<i64: 64, 256>}, {transform_indices = @transform_1, window_bounds = array<i64: 64, 256>}, {transform_indices = @transform_2, window_bounds = array<i64: 1, 8, 128>}]} {
    %c0_i32 = arith.constant 0 : i32
    %0 = arith.cmpi eq, %arg1, %c0_i32 : i32
    %1 = arith.extui %0 : i1 to i32
    %c0_i32_0 = arith.constant 0 : i32
    %2 = arith.cmpi ne, %1, %c0_i32_0 : i32
    scf.if %2 {
      %cst_16 = arith.constant 0.000000e+00 : f32
      %22 = vector.broadcast %cst_16 : f32 to vector<64x1xf32>
      %c0_17 = arith.constant 0 : index
      %c0_18 = arith.constant 0 : index
      %23 = vector.load %arg6[%c0_17, %c0_18] : memref<64x1xf32, #tpu.memory_space<vmem>>, vector<64x1xf32>
      tpu.vector_store %arg6[%c0_17, %c0_18], %22 {strides = array<i32>} : memref<64x1xf32, #tpu.memory_space<vmem>>, vector<64x1xf32>,
      %cst_19 = arith.constant 0.000000e+00 : f32
      %24 = vector.broadcast %cst_19 : f32 to vector<64x1xf32>
      %c0_20 = arith.constant 0 : index
      %c0_21 = arith.constant 0 : index
      %25 = vector.load %arg7[%c0_20, %c0_21] : memref<64x1xf32, #tpu.memory_space<vmem>>, vector<64x1xf32>
      tpu.vector_store %arg7[%c0_20, %c0_21], %24 {strides = array<i32>} : memref<64x1xf32, #tpu.memory_space<vmem>>, vector<64x1xf32>,
    } else {
    }
    %c0 = arith.constant 0 : index
    %c0_1 = arith.constant 0 : index
    %3 = vector.load %arg3[%c0, %c0_1] : memref<64x256xf32, #tpu.memory_space<vmem>>, vector<64x256xf32>
    %c0_2 = arith.constant 0 : index
    %c0_3 = arith.constant 0 : index
    %4 = vector.load %arg4[%c0_2, %c0_3] : memref<64x256xi8, #tpu.memory_space<vmem>>, vector<64x256xi8>
    %c0_i8 = arith.constant 0 : i8
    %5 = vector.broadcast %c0_i8 : i8 to vector<64x256xi8>
    %6 = arith.cmpi ne, %4, %5 : vector<64x256xi8>
    %cst = arith.constant 0.000000e+00 : f32
    %7 = vector.broadcast %cst : f32 to vector<64x256xf32>
    %8 = arith.select %6, %3, %7 : vector<64x256xi1>, vector<64x256xf32>
    %c0_4 = arith.constant 0 : index
    %c0_5 = arith.constant 0 : index
    %9 = vector.load %arg6[%c0_4, %c0_5] : memref<64x1xf32, #tpu.memory_space<vmem>>, vector<64x1xf32>
    %cst_6 = arith.constant dense<0.000000e+00> : vector<64xf32>
    %10 = vector.multi_reduction <add>, %3, %cst_6 [1] : vector<64x256xf32> to vector<64xf32>
    %11 = vector.shape_cast %10 : vector<64xf32> to vector<64x1xf32>
    %12 = arith.addf %9, %11 : vector<64x1xf32>
    %c0_7 = arith.constant 0 : index
    %c0_8 = arith.constant 0 : index
    %13 = vector.load %arg6[%c0_7, %c0_8] : memref<64x1xf32, #tpu.memory_space<vmem>>, vector<64x1xf32>
    tpu.vector_store %arg6[%c0_7, %c0_8], %12 {strides = array<i32>} : memref<64x1xf32, #tpu.memory_space<vmem>>, vector<64x1xf32>,
    %c0_9 = arith.constant 0 : index
    %c0_10 = arith.constant 0 : index
    %14 = vector.load %arg7[%c0_9, %c0_10] : memref<64x1xf32, #tpu.memory_space<vmem>>, vector<64x1xf32>
    %cst_11 = arith.constant dense<0.000000e+00> : vector<64xf32>
    %15 = vector.multi_reduction <add>, %8, %cst_11 [1] : vector<64x256xf32> to vector<64xf32>
    %16 = vector.shape_cast %15 : vector<64xf32> to vector<64x1xf32>
    %17 = arith.addf %14, %16 : vector<64x1xf32>
    %c0_12 = arith.constant 0 : index
    %c0_13 = arith.constant 0 : index
    %18 = vector.load %arg7[%c0_12, %c0_13] : memref<64x1xf32, #tpu.memory_space<vmem>>, vector<64x1xf32>
    tpu.vector_store %arg7[%c0_12, %c0_13], %17 {strides = array<i32>} : memref<64x1xf32, #tpu.memory_space<vmem>>, vector<64x1xf32>,
    %c0_i32_14 = arith.constant 0 : i32
    %19 = arith.cmpi eq, %arg1, %c0_i32_14 : i32
    %20 = arith.extui %19 : i1 to i32
    %c0_i32_15 = arith.constant 0 : i32
    %21 = arith.cmpi ne, %20, %c0_i32_15 : i32
    scf.if %21 {
      %c0_16 = arith.constant 0 : index
      %c0_17 = arith.constant 0 : index
      %22 = vector.load %arg6[%c0_16, %c0_17] : memref<64x1xf32, #tpu.memory_space<vmem>>, vector<64x1xf32>
      %c0_18 = arith.constant 0 : index
      %c0_19 = arith.constant 0 : index
      %23 = vector.load %arg7[%c0_18, %c0_19] : memref<64x1xf32, #tpu.memory_space<vmem>>, vector<64x1xf32>
      %cst_20 = arith.constant 0.000000e+00 : f32
      %24 = vector.broadcast %cst_20 : f32 to vector<64x1xf32>
      %25 = arith.cmpf one, %22, %24 : vector<64x1xf32>
      %cst_21 = arith.constant 0.000000e+00 : f32
      %26 = vector.broadcast %cst_21 : f32 to vector<64x1xf32>
      %27 = arith.cmpf one, %23, %26 : vector<64x1xf32>
      %28 = arith.andi %25, %27 : vector<64x1xi1>
      %cst_22 = arith.constant 0.000000e+00 : f32
      %29 = vector.broadcast %cst_22 : f32 to vector<64x1xf32>
      %30 = arith.cmpf oeq, %22, %29 : vector<64x1xf32>
      %cst_23 = arith.constant 1.000000e+00 : f32
      %31 = vector.broadcast %cst_23 : f32 to vector<64x1xf32>
      %32 = arith.select %30, %31, %22 : vector<64x1xi1>, vector<64x1xf32>
      %33 = tpu.reciprocal %32 : vector<64x1xf32> -> vector<64x1xf32>
      %34 = arith.mulf %23, %33 : vector<64x1xf32>
      %cst_24 = arith.constant 1.000000e+00 : f32
      %35 = vector.broadcast %cst_24 : f32 to vector<64x1xf32>
      %36 = arith.select %28, %34, %35 : vector<64x1xi1>, vector<64x1xf32>
      %37 = math.log %36 : vector<64x1xf32>
      %cst_25 = arith.constant 0.000000e+00 : f32
      %38 = vector.broadcast %cst_25 : f32 to vector<64x1xf32>
      %39 = arith.addf %37, %38 : vector<64x1xf32>
      %c0_26 = arith.constant 0 : index
      %40 = memref.load %arg2[%c0_26] : memref<1xi32, #tpu.memory_space<smem>>
      %c80_i32 = arith.constant 80 : i32
      %41 = arith.cmpi slt, %40, %c80_i32 : i32
      %42 = arith.mulf %39, %39 : vector<64x1xf32>
      %cst_27 = arith.constant 0.000000e+00 : f32
      %43 = vector.broadcast %cst_27 : f32 to vector<64x1xf32>
      %44 = arith.subf %43, %39 : vector<64x1xf32>
      %45 = arith.select %41, %42, %44 : vector<64x1xf32>
      %cst_28 = arith.constant 0.000000e+00 : f32
      %46 = vector.broadcast %cst_28 : f32 to vector<64x1xf32>
      %47 = arith.select %28, %45, %46 : vector<64x1xi1>, vector<64x1xf32>
      %cst_29 = arith.constant 0.00999999977 : f32
      %48 = vector.broadcast %cst_29 : f32 to vector<64x1xf32>
      %49 = arith.subf %47, %48 : vector<64x1xf32>
      %cst_30 = arith.constant 0.000000e+00 : f32
      %50 = vector.broadcast %cst_30 : f32 to vector<64x1xf32>
      %51 = arith.maximumf %49, %50 : vector<64x1xf32>
      %52 = vector.shape_cast %51 : vector<64x1xf32> to vector<1x64x1xf32>
      %cst_31 = arith.constant dense<0.000000e+00> : vector<1xf32>
      %53 = vector.multi_reduction <add>, %52, %cst_31 [1, 2] : vector<1x64x1xf32> to vector<1xf32>
      %54 = vector.shape_cast %53 : vector<1xf32> to vector<1x1x1xf32>
      %55 = vector.extract %54[0, 0, 0] : f32 from vector<1x1x1xf32>
      %56 = vector.broadcast %55 : f32 to vector<1x8x128xf32>
      %c0_32 = arith.constant 0 : index
      %c0_33 = arith.constant 0 : index
      %c0_34 = arith.constant 0 : index
      %57 = vector.load %arg5[%c0_32, %c0_33, %c0_34] : memref<1x8x128xf32, #tpu.memory_space<vmem>>, vector<1x8x128xf32>
      tpu.vector_store %arg5[%c0_32, %c0_33, %c0_34], %56 {strides = array<i32>} : memref<1x8x128xf32, #tpu.memory_space<vmem>>, vector<1x8x128xf32>,
    } else {
    }
    return
  }
  func.func @transform_0(%arg0: i32, %arg1: i32, %arg2: memref<1xi32, #tpu.memory_space<smem>>) -> (i32, i32) {
    %c0_i32 = arith.constant 0 : i32
    return %arg0, %arg1 : i32, i32
  }
  func.func @transform_1(%arg0: i32, %arg1: i32, %arg2: memref<1xi32, #tpu.memory_space<smem>>) -> (i32, i32) {
    %c0_i32 = arith.constant 0 : i32
    return %arg0, %arg1 : i32, i32
  }
  func.func @transform_2(%arg0: i32, %arg1: i32, %arg2: memref<1xi32, #tpu.memory_space<smem>>) -> (i32, i32, i32) {
    %c0_i32 = arith.constant 0 : i32
    %c0_i32_0 = arith.constant 0 : i32
    %c0_i32_1 = arith.constant 0 : i32
    return %arg0, %c0_i32, %c0_i32_0 : i32, i32, i32
  }
}

</mosaic_0001>

<llo_original>
// kernel: sample_loss_forward.1
$region0: #{sample_loss_forward.1}
  #allocation0 [shape = 'u32[]', space=smem, size = 0x4, offset = 0x4, fixed_abs, tag = 'smem constant byte address 0x4 - core index']
  #allocation1 [shape = 'u32[144,128]{1,0:T(1,128)}', space=vmem, size = 0x12000, scoped, tag = 'internal scratch']
  #allocation2 [shape = 'f32[64,1]{1,0:T(8,128)}', space=vmem, size = 0x8000, scoped, tag = 'scratch operand']
  #allocation3 [shape = 'f32[64,1]{1,0:T(8,128)}', space=vmem, size = 0x8000, scoped, tag = 'scratch operand']
  #allocation4 [shape = 's32[1]{0}', space=sflag, size = 0x4, scoped, tag = 'scoped memory for sample_loss_forward.1']
  #allocation5 [shape = 's32[1]{0:T(128)S(6)}', space=smem, size = 0x200, scoped, tag = 'prefetched SMEM operand 0']
  %s0 = inlined_call_operand.<no memory space> [shape: s32[1], index: 0, kind: input, shape index: {}]
  %s1 = inlined_call_operand.vmem [shape: f32[128,256], index: 1, kind: input, shape index: {}]
  %s2 = inlined_call_operand.vmem [shape: s8[128,256], index: 2, kind: input, shape index: {}]
  %s3 = inlined_call_operand.vmem [shape: f32[2,8,128], index: 3, kind: output, shape index: {}]
  %s4 = sld [smem:[#allocation0]]
  $region49: #{sample_loss_forward.1} parent=0
    _
  %s6 = ssub.s32 1, %s4
  %s7 = scalar_select 0, %s6, %s4
  %8 = sst [smem:[#allocation5]] %s0
  loop: start=0, step=1, limit=4
  $region2: #{sample_loss_forward.1} parent=0 // loop_pre_header
    _
  $region3: #{sample_loss_forward.1} parent=0 // loop_header
    %s10 = sphi 0, %s14
    %p11 = scmp.ge.s32.totalorder %s10, 4
    %s17 = sphi 0, %s29
    %s18 = sphi 0, %s25
    %s19 = sphi 0, %s17
    %s20 = sphi 0, %s18
    %s21 = sphi 0, %s19
    %s22 = sphi 0, %s20
    %s34 = sphi 0, %s36
    %s37 = sphi 0, %s34
    %s38 = sphi 0, %s37
    %s54 = sphi 0, %s38
    %s62 = sphi 0, %s64
    %s65 = sphi 0, %s62
    %s66 = sphi 0, %s65
    %s82 = sphi 0, %s66
    %s88 = sphi 0, %s90
    %s91 = sphi 0, %s88
    %s92 = sphi 0, %s91
    %s108 = sphi 0, %s92
  $region4: #{sample_loss_forward.1} parent=0 // loop_header_branch
    %13 = sbr.rel (%p11) target = $region8
  $region5: #{sample_loss_forward.1} parent=0 // loop_body
    %s15 = ssub.s32 %s10, 1
    %s16 = ssub.s32 %s10, 2
    %s23 = sadd.s32 1, %s18
    %p24 = scmp.ge.s32.totalorder %s23, 1
    %s25 = scalar_select %p24, 0, %s23
    %s26 = sadd.s32 1, %s17
    %s27 = scalar_select %p24, %s26, %s17
    %p28 = scmp.ge.s32.totalorder %s27, 2
    %s29 = scalar_select %p28, 0, %s27
    %s30 = ssub.s32 %s17, %s29
    %s31 = ssub.s32 %s18, %s25
    %s32 = sor.u32 %s30, %s31
    %p33 = scmp.eq.s32.totalorder %s32, 0
    %s35 = sadd.s32 %s34, 1
    %s36 = scalar_select %p33, %s34, %s35
    %p39 = pneg %p33
    %p40 = scmp.eq.s32.totalorder %s10, 1
    %p41 = por %p39, %p40
    %p42 = scmp.ne.s32.totalorder %s34, %s37
    %p43 = scmp.eq.s32.totalorder %s10, 0
    %p44 = por %p42, %p43
    %p45 = scmp.ne.s32.totalorder %s34, %s37
    %p46 = scmp.eq.s32.totalorder %s15, 1
    %p47 = por %p45, %p46
    %p48 = scmp.ne.s32.totalorder %s37, %s38
    %p49 = scmp.eq.s32.totalorder %s15, 0
    %p50 = por %p48, %p49
    %p51 = scmp.ne.s32.totalorder %s37, %s38
    %p52 = scmp.eq.s32.totalorder %s16, 1
    %p53 = por %p51, %p52
    %p55 = scmp.ne.s32.totalorder %s38, %s54
    %p56 = scmp.eq.s32.totalorder %s16, 0
    %p57 = por %p55, %p56
    %s58 = ssub.s32 %s17, %s29
    %s59 = ssub.s32 %s18, %s25
    %s60 = sor.u32 %s58, %s59
    %p61 = scmp.eq.s32.totalorder %s60, 0
    %s63 = sadd.s32 %s62, 1
    %s64 = scalar_select %p61, %s62, %s63
    %p67 = pneg %p61
    %p68 = scmp.eq.s32.totalorder %s10, 1
    %p69 = por %p67, %p68
    %p70 = scmp.ne.s32.totalorder %s62, %s65
    %p71 = scmp.eq.s32.totalorder %s10, 0
    %p72 = por %p70, %p71
    %p73 = scmp.ne.s32.totalorder %s62, %s65
    %p74 = scmp.eq.s32.totalorder %s15, 1
    %p75 = por %p73, %p74
    %p76 = scmp.ne.s32.totalorder %s65, %s66
    %p77 = scmp.eq.s32.totalorder %s15, 0
    %p78 = por %p76, %p77
    %p79 = scmp.ne.s32.totalorder %s65, %s66
    %p80 = scmp.eq.s32.totalorder %s16, 1
    %p81 = por %p79, %p80
    %p83 = scmp.ne.s32.totalorder %s66, %s82
    %p84 = scmp.eq.s32.totalorder %s16, 0
    %p85 = por %p83, %p84
    %s86 = ssub.s32 %s17, %s29
    %p87 = scmp.eq.s32.totalorder %s86, 0
    %s89 = sadd.s32 %s88, 1
    %s90 = scalar_select %p87, %s88, %s89
    %p93 = pneg %p87
    %p94 = scmp.eq.s32.totalorder %s10, 1
    %p95 = por %p93, %p94
    %p96 = scmp.ne.s32.totalorder %s88, %s91
    %p97 = scmp.eq.s32.totalorder %s10, 0
    %p98 = por %p96, %p97
    %p99 = scmp.ne.s32.totalorder %s88, %s91
    %p100 = scmp.eq.s32.totalorder %s15, 1
    %p101 = por %p99, %p100
    %p102 = scmp.ne.s32.totalorder %s91, %s92
    %p103 = scmp.eq.s32.totalorder %s15, 0
    %p104 = por %p102, %p103
    %p105 = scmp.ne.s32.totalorder %s91, %s92
    %p106 = scmp.eq.s32.totalorder %s16, 1
    %p107 = por %p105, %p106
    %p109 = scmp.ne.s32.totalorder %s92, %s108
    %p110 = scmp.eq.s32.totalorder %s16, 0
    %p111 = por %p109, %p110
    %p112 = scmp.le.s32.totalorder 1, %s10
    %p113 = scmp.lt.s32.totalorder %s10, 3
    %p114 = pnand %p112, %p113
    %p115 = pneg %p114
    // Predicated region
    $region9: #{sample_loss_forward.1} parent=5 // pred_check
      _
    $region10: #{sample_loss_forward.1} parent=5 // pred_check_branch
      %117 = sbr.rel (%p114) target = $region12
    $region11: #{sample_loss_forward.1} parent=5 // pred_region
      %s118 = ssub.s32 %s10, 1
    $region12: #{sample_loss_forward.1} parent=5 // pred_fallthru
      _
    %p119 = scmp.lt.s32.totalorder %s10, 2
    // Predicated region
    $region13: #{sample_loss_forward.1} parent=5 // pred_check
      %p120 = pneg %p119
    $region14: #{sample_loss_forward.1} parent=5 // pred_check_branch
      %122 = sbr.rel (%p120) target = $region16
    $region15: #{sample_loss_forward.1} parent=5 // pred_region
      // Predicated region
      $region17: #{sample_loss_forward.1} parent=15 // pred_check
        %p123 = pneg %p44
      $region18: #{sample_loss_forward.1} parent=15 // pred_check_branch
        %125 = sbr.rel (%p123) target = $region20
      $region19: #{sample_loss_forward.1} parent=15 // pred_region
        %s126 = smul.u32 8, %s17
        %s127 = smul.u32 2, %s18
        %p128 = scmp.lt.s32.totalorder %s126, 15
        %s129 = scalar_select %p128, %s126, 15
        %p130 = scmp.lt.s32.totalorder %s127, 1
        %s131 = scalar_select %p130, %s127, 1
        %s132 = smul.addr %s129, 2
        %s133 = sadd.s32 %s131, %s132
        %s134 = smul.addr %s133, 8
        %s135 = scalar_lea.vmem %s1, %s134
        %s136 = smul.u32 8, %s17
        %s137 = smul.u32 2, %s18
      $region20: #{sample_loss_forward.1} parent=15 // pred_fallthru
        _
      // Predicated region
      $region21: #{sample_loss_forward.1} parent=15 // pred_check
        %p138 = pneg %p72
      $region22: #{sample_loss_forward.1} parent=15 // pred_check_branch
        %140 = sbr.rel (%p138) target = $region24
      $region23: #{sample_loss_forward.1} parent=15 // pred_region
        %s141 = smul.u32 2, %s17
        %s142 = smul.u32 2, %s18
        %p143 = scmp.lt.s32.totalorder %s141, 3
        %s144 = scalar_select %p143, %s141, 3
        %p145 = scmp.lt.s32.totalorder %s142, 1
        %s146 = scalar_select %p145, %s142, 1
        %s147 = smul.addr %s144, 2
        %s148 = sadd.s32 %s146, %s147
        %s149 = smul.addr %s148, 8
        %s150 = scalar_lea.vmem %s2, %s149
        %s151 = smul.u32 2, %s17
        %s152 = smul.u32 2, %s18
      $region24: #{sample_loss_forward.1} parent=15 // pred_fallthru
        _
    $region16: #{sample_loss_forward.1} parent=5 // pred_fallthru
      _
    %p153 = scmp.le.s32.totalorder 1, %s10
    %p154 = scmp.lt.s32.totalorder %s10, 3
    %p155 = pnand %p153, %p154
    %p156 = pneg %p155
    // Predicated region
    $region25: #{sample_loss_forward.1} parent=5 // pred_check
      _
    $region26: #{sample_loss_forward.1} parent=5 // pred_check_branch
      %158 = sbr.rel (%p155) target = $region28
    $region27: #{sample_loss_forward.1} parent=5 // pred_region
      %s159 = ssub.s32 %s10, 1
      %s160 = smul.u32 8, %s19
      %s161 = smul.u32 2, %s20
      %p162 = scmp.lt.s32.totalorder %s160, 15
      %s163 = scalar_select %p162, %s160, 15
      %p164 = scmp.lt.s32.totalorder %s161, 1
      %s165 = scalar_select %p164, %s161, 1
      %s166 = smul.addr %s163, 2
      %s167 = sadd.s32 %s165, %s166
      %s168 = smul.addr %s167, 8
      %s169 = scalar_lea.vmem %s1, %s168
      %p170 = pneg %p50
      %p171 = pneg %p47
      %s172 = smul.u32 2, %s19
      %s173 = smul.u32 2, %s20
      %p174 = scmp.lt.s32.totalorder %s172, 3
      %s175 = scalar_select %p174, %s172, 3
      %p176 = scmp.lt.s32.totalorder %s173, 1
      %s177 = scalar_select %p176, %s173, 1
      %s178 = smul.addr %s175, 2
      %s179 = sadd.s32 %s177, %s178
      %s180 = smul.addr %s179, 8
      %s181 = scalar_lea.vmem %s2, %s180
      %p182 = pneg %p78
      %p183 = pneg %p75
      %p184 = pneg %p104
      %p185 = pneg %p101
      %p186 = scmp.lt.s32.totalorder %s19, 1
      %s187 = scalar_select %p186, %s19, 1
      %s188 = smul.addr %s187, 8
      %s189 = scalar_lea.vmem %s3, %s188
      %s190 = smul.u32 8, %s19
      %s191 = smul.u32 2, %s20
      %p192 = scmp.lt.s32.totalorder %s190, 15
      %s193 = scalar_select %p192, %s190, 15
      %p194 = scmp.lt.s32.totalorder %s191, 1
      %s195 = scalar_select %p194, %s191, 1
      %s196 = smul.addr %s193, 2
      %s197 = sadd.s32 %s195, %s196
      %s198 = smul.addr %s197, 8
      %s199 = scalar_lea.vmem %s1, %s198
      %s200 = smul.u32 8, %s19
      %s201 = smul.u32 2, %s20
      %s202 = smul.u32 2, %s19
      %s203 = smul.u32 2, %s20
      %p204 = scmp.lt.s32.totalorder %s202, 3
      %s205 = scalar_select %p204, %s202, 3
      %p206 = scmp.lt.s32.totalorder %s203, 1
      %s207 = scalar_select %p206, %s203, 1
      %s208 = smul.addr %s205, 2
      %s209 = sadd.s32 %s207, %s208
      %s210 = smul.addr %s209, 8
      %s211 = scalar_lea.vmem %s2, %s210
      %s212 = smul.u32 2, %s19
      %s213 = smul.u32 2, %s20
      %p214 = scmp.lt.s32.totalorder %s19, 1
      %s215 = scalar_select %p214, %s19, 1
      %s216 = smul.addr %s215, 8
      %s217 = scalar_lea.vmem %s3, %s216
      %p220 = scmp.eq.s32.totalorder %s20, 0
      // Predicated region
      $region29: #{sample_loss_forward.1} parent=27 // pred_check
        %p221 = pneg %p220
      $region30: #{sample_loss_forward.1} parent=27 // pred_check_branch
        %223 = sbr.rel (%p221) target = $region32
      $region31: #{sample_loss_forward.1} parent=27 // pred_region
        %vm224 = vcmask 7168
        %225 = vst.msk [vmem:[#allocation2] sm:$0xff] %vm224, 0.0
        %226 = vst.msk [vmem:[#allocation2 + $0x8] sm:$0xff] %vm224, 0.0
        %227 = vst.msk [vmem:[#allocation2 + $0x10] sm:$0xff] %vm224, 0.0
        %228 = vst.msk [vmem:[#allocation2 + $0x18] sm:$0xff] %vm224, 0.0
        %229 = vst.msk [vmem:[#allocation2 + $0x20] sm:$0xff] %vm224, 0.0
        %230 = vst.msk [vmem:[#allocation2 + $0x28] sm:$0xff] %vm224, 0.0
        %231 = vst.msk [vmem:[#allocation2 + $0x30] sm:$0xff] %vm224, 0.0
        %232 = vst.msk [vmem:[#allocation2 + $0x38] sm:$0xff] %vm224, 0.0
        %233 = vst.msk [vmem:[#allocation3] sm:$0xff] %vm224, 0.0
        %234 = vst.msk [vmem:[#allocation3 + $0x8] sm:$0xff] %vm224, 0.0
        %235 = vst.msk [vmem:[#allocation3 + $0x10] sm:$0xff] %vm224, 0.0
        %236 = vst.msk [vmem:[#allocation3 + $0x18] sm:$0xff] %vm224, 0.0
        %237 = vst.msk [vmem:[#allocation3 + $0x20] sm:$0xff] %vm224, 0.0
        %238 = vst.msk [vmem:[#allocation3 + $0x28] sm:$0xff] %vm224, 0.0
        %239 = vst.msk [vmem:[#allocation3 + $0x30] sm:$0xff] %vm224, 0.0
        %240 = vst.msk [vmem:[#allocation3 + $0x38] sm:$0xff] %vm224, 0.0
      $region32: #{sample_loss_forward.1} parent=27 // pred_fallthru
        _
      %v241 = vld [vmem:[%s199] sm:$0xff]
      %v242 = vld [vmem:[%s199 + $0x8] sm:$0xff]
      %v243 = vld [vmem:[%s199 + $0x10] sm:$0xff]
      %v244 = vld [vmem:[%s199 + $0x18] sm:$0xff]
      %v245 = vld [vmem:[%s199 + $0x20] sm:$0xff]
      %v246 = vld [vmem:[%s199 + $0x28] sm:$0xff]
      %v247 = vld [vmem:[%s199 + $0x30] sm:$0xff]
      %v248 = vld [vmem:[%s199 + $0x38] sm:$0xff]
      %v249 = vld [vmem:[%s199 + $0x40] sm:$0xff]
      %v250 = vld [vmem:[%s199 + $0x48] sm:$0xff]
      %v251 = vld [vmem:[%s199 + $0x50] sm:$0xff]
      %v252 = vld [vmem:[%s199 + $0x58] sm:$0xff]
      %v253 = vld [vmem:[%s199 + $0x60] sm:$0xff]
      %v254 = vld [vmem:[%s199 + $0x68] sm:$0xff]
      %v255 = vld [vmem:[%s199 + $0x70] sm:$0xff]
      %v256 = vld [vmem:[%s199 + $0x78] sm:$0xff]
      %v257 = vld [vmem:[%s211] sm:$0xff]
      %v258 = vld [vmem:[%s211 + $0x8] sm:$0xff]
      %v259 = vld [vmem:[%s211 + $0x10] sm:$0xff]
      %v260 = vld [vmem:[%s211 + $0x18] sm:$0xff]
      %vm261 = vnez %v257
      %vm262 = vnez %v258
      %vm263 = vnez %v259
      %vm264 = vnez %v260
      %v265 = vsel %vm261, 16843009, 0
      %v266 = vsel %vm262, 16843009, 0
      %v267 = vsel %vm263, 16843009, 0
      %v268 = vsel %vm264, 16843009, 0
      %v269 = vunpack.c.0.s8 %v265
      %v270 = vunpack.c.0.s8 %v266
      %v271 = vunpack.c.1.s8 %v265
      %v272 = vunpack.c.1.s8 %v266
      %v273 = vunpack.c.2.s8 %v265
      %v274 = vunpack.c.2.s8 %v266
      %v275 = vunpack.c.3.s8 %v265
      %v276 = vunpack.c.3.s8 %v266
      %v277 = vunpack.c.0.s8 %v267
      %v278 = vunpack.c.0.s8 %v268
      %v279 = vunpack.c.1.s8 %v267
      %v280 = vunpack.c.1.s8 %v268
      %v281 = vunpack.c.2.s8 %v267
      %v282 = vunpack.c.2.s8 %v268
      %v283 = vunpack.c.3.s8 %v267
      %v284 = vunpack.c.3.s8 %v268
      %v285 = vpack.c.b16 %v270, %v269
      %v286 = vpack.c.b8 %v285, %v285
      %v287 = vpack.c.b16 %v272, %v271
      %v288 = vpack.c.b8 %v287, %v287
      %v289 = vpack.c.b16 %v274, %v273
      %v290 = vpack.c.b8 %v289, %v289
      %v291 = vpack.c.b16 %v276, %v275
      %v292 = vpack.c.b8 %v291, %v291
      %v293 = vpack.c.b16 %v278, %v277
      %v294 = vpack.c.b8 %v293, %v293
      %v295 = vpack.c.b16 %v280, %v279
      %v296 = vpack.c.b8 %v295, %v295
      %v297 = vpack.c.b16 %v282, %v281
      %v298 = vpack.c.b8 %v297, %v297
      %v299 = vpack.c.b16 %v284, %v283
      %v300 = vpack.c.b8 %v299, %v299
      %vm301 = vnez %v286
      %vm302 = vnez %v288
      %vm303 = vnez %v290
      %vm304 = vnez %v292
      %vm305 = vnez %v294
      %vm306 = vnez %v296
      %vm307 = vnez %v298
      %vm308 = vnez %v300
      %v309 = vsel %vm301, 16843009, 0
      %v310 = vsel %vm302, 16843009, 0
      %v311 = vsel %vm303, 16843009, 0
      %v312 = vsel %vm304, 16843009, 0
      %v313 = vsel %vm305, 16843009, 0
      %v314 = vsel %vm306, 16843009, 0
      %v315 = vsel %vm307, 16843009, 0
      %v316 = vsel %vm308, 16843009, 0
      %v317 = vunpack.c.0.s8 %v309
      %v318 = vunpack.c.1.s8 %v309
      %v319 = vunpack.c.0.s8 %v310
      %v320 = vunpack.c.1.s8 %v310
      %v321 = vunpack.c.0.s8 %v311
      %v322 = vunpack.c.1.s8 %v311
      %v323 = vunpack.c.0.s8 %v312
      %v324 = vunpack.c.1.s8 %v312
      %v325 = vunpack.c.0.s8 %v313
      %v326 = vunpack.c.1.s8 %v313
      %v327 = vunpack.c.0.s8 %v314
      %v328 = vunpack.c.1.s8 %v314
      %v329 = vunpack.c.0.s8 %v315
      %v330 = vunpack.c.1.s8 %v315
      %v331 = vunpack.c.0.s8 %v316
      %v332 = vunpack.c.1.s8 %v316
      %vm333 = vcmp.ne.s32.totalorder %v317, 0
      %vm334 = vcmp.ne.s32.totalorder %v318, 0
      %vm335 = vcmp.ne.s32.totalorder %v319, 0
      %vm336 = vcmp.ne.s32.totalorder %v320, 0
      %vm337 = vcmp.ne.s32.totalorder %v321, 0
      %vm338 = vcmp.ne.s32.totalorder %v322, 0
      %vm339 = vcmp.ne.s32.totalorder %v323, 0
      %vm340 = vcmp.ne.s32.totalorder %v324, 0
      %vm341 = vcmp.ne.s32.totalorder %v325, 0
      %vm342 = vcmp.ne.s32.totalorder %v326, 0
      %vm343 = vcmp.ne.s32.totalorder %v327, 0
      %vm344 = vcmp.ne.s32.totalorder %v328, 0
      %vm345 = vcmp.ne.s32.totalorder %v329, 0
      %vm346 = vcmp.ne.s32.totalorder %v330, 0
      %vm347 = vcmp.ne.s32.totalorder %v331, 0
      %vm348 = vcmp.ne.s32.totalorder %v332, 0
      %v349 = vsel %vm333, %v241, 0.0
      %v350 = vsel %vm334, %v242, 0.0
      %v351 = vsel %vm335, %v243, 0.0
      %v352 = vsel %vm336, %v244, 0.0
      %v353 = vsel %vm337, %v245, 0.0
      %v354 = vsel %vm338, %v246, 0.0
      %v355 = vsel %vm339, %v247, 0.0
      %v356 = vsel %vm340, %v248, 0.0
      %v357 = vsel %vm341, %v249, 0.0
      %v358 = vsel %vm342, %v250, 0.0
      %v359 = vsel %vm343, %v251, 0.0
      %v360 = vsel %vm344, %v252, 0.0
      %v361 = vsel %vm345, %v253, 0.0
      %v362 = vsel %vm346, %v254, 0.0
      %v363 = vsel %vm347, %v255, 0.0
      %v364 = vsel %vm348, %v256, 0.0
      %v365 = vld [vmem:[#allocation2] sm:$0xff]
      %v366 = vld [vmem:[#allocation2 + $0x8] sm:$0xff]
      %v367 = vld [vmem:[#allocation2 + $0x10] sm:$0xff]
      %v368 = vld [vmem:[#allocation2 + $0x18] sm:$0xff]
      %v369 = vld [vmem:[#allocation2 + $0x20] sm:$0xff]
      %v370 = vld [vmem:[#allocation2 + $0x28] sm:$0xff]
      %v371 = vld [vmem:[#allocation2 + $0x30] sm:$0xff]
      %v372 = vld [vmem:[#allocation2 + $0x38] sm:$0xff]
      %v373 = vadd.f32 %v241, %v242
      %374 = vadd.xlane.f32.xlu0 %v373
      %v375 = vpop.xlane.xlu0 %374
      %v376 = vadd.f32 %v243, %v244
      %377 = vadd.xlane.f32.xlu0 %v376
      %v378 = vpop.xlane.xlu0 %377
      %v379 = vadd.f32 %v245, %v246
      %380 = vadd.xlane.f32.xlu0 %v379
      %v381 = vpop.xlane.xlu0 %380
      %v382 = vadd.f32 %v247, %v248
      %383 = vadd.xlane.f32.xlu0 %v382
      %v384 = vpop.xlane.xlu0 %383
      %v385 = vadd.f32 %v249, %v250
      %386 = vadd.xlane.f32.xlu0 %v385
      %v387 = vpop.xlane.xlu0 %386
      %v388 = vadd.f32 %v251, %v252
      %389 = vadd.xlane.f32.xlu0 %v388
      %v390 = vpop.xlane.xlu0 %389
      %v391 = vadd.f32 %v253, %v254
      %392 = vadd.xlane.f32.xlu0 %v391
      %v393 = vpop.xlane.xlu0 %392
      %v394 = vadd.f32 %v255, %v256
      %395 = vadd.xlane.f32.xlu0 %v394
      %v396 = vpop.xlane.xlu0 %395
      %v397 = vadd.f32 %v365, %v375
      %v398 = vadd.f32 %v366, %v378
      %v399 = vadd.f32 %v367, %v381
      %v400 = vadd.f32 %v368, %v384
      %v401 = vadd.f32 %v369, %v387
      %v402 = vadd.f32 %v370, %v390
      %v403 = vadd.f32 %v371, %v393
      %v404 = vadd.f32 %v372, %v396
      %vm405 = vcmask 7168
      %406 = vst.msk [vmem:[#allocation2] sm:$0xff] %vm405, %v397
      %407 = vst.msk [vmem:[#allocation2 + $0x8] sm:$0xff] %vm405, %v398
      %408 = vst.msk [vmem:[#allocation2 + $0x10] sm:$0xff] %vm405, %v399
      %409 = vst.msk [vmem:[#allocation2 + $0x18] sm:$0xff] %vm405, %v400
      %410 = vst.msk [vmem:[#allocation2 + $0x20] sm:$0xff] %vm405, %v401
      %411 = vst.msk [vmem:[#allocation2 + $0x28] sm:$0xff] %vm405, %v402
      %412 = vst.msk [vmem:[#allocation2 + $0x30] sm:$0xff] %vm405, %v403
      %413 = vst.msk [vmem:[#allocation2 + $0x38] sm:$0xff] %vm405, %v404
      %v414 = vld [vmem:[#allocation3] sm:$0xff]
      %v415 = vld [vmem:[#allocation3 + $0x8] sm:$0xff]
      %v416 = vld [vmem:[#allocation3 + $0x10] sm:$0xff]
      %v417 = vld [vmem:[#allocation3 + $0x18] sm:$0xff]
      %v418 = vld [vmem:[#allocation3 + $0x20] sm:$0xff]
      %v419 = vld [vmem:[#allocation3 + $0x28] sm:$0xff]
      %v420 = vld [vmem:[#allocation3 + $0x30] sm:$0xff]
      %v421 = vld [vmem:[#allocation3 + $0x38] sm:$0xff]
      %v422 = vadd.f32 %v349, %v350
      %423 = vadd.xlane.f32.xlu0 %v422
      %v424 = vpop.xlane.xlu0 %423
      %v425 = vadd.f32 %v351, %v352
      %426 = vadd.xlane.f32.xlu0 %v425
      %v427 = vpop.xlane.xlu0 %426
      %v428 = vadd.f32 %v353, %v354
      %429 = vadd.xlane.f32.xlu0 %v428
      %v430 = vpop.xlane.xlu0 %429
      %v431 = vadd.f32 %v355, %v356
      %432 = vadd.xlane.f32.xlu0 %v431
      %v433 = vpop.xlane.xlu0 %432
      %v434 = vadd.f32 %v357, %v358
      %435 = vadd.xlane.f32.xlu0 %v434
      %v436 = vpop.xlane.xlu0 %435
      %v437 = vadd.f32 %v359, %v360
      %438 = vadd.xlane.f32.xlu0 %v437
      %v439 = vpop.xlane.xlu0 %438
      %v440 = vadd.f32 %v361, %v362
      %441 = vadd.xlane.f32.xlu0 %v440
      %v442 = vpop.xlane.xlu0 %441
      %v443 = vadd.f32 %v363, %v364
      %444 = vadd.xlane.f32.xlu0 %v443
      %v445 = vpop.xlane.xlu0 %444
      %v446 = vadd.f32 %v414, %v424
      %v447 = vadd.f32 %v415, %v427
      %v448 = vadd.f32 %v416, %v430
      %v449 = vadd.f32 %v417, %v433
      %v450 = vadd.f32 %v418, %v436
      %v451 = vadd.f32 %v419, %v439
      %v452 = vadd.f32 %v420, %v442
      %v453 = vadd.f32 %v421, %v445
      %454 = vst.msk [vmem:[#allocation3] sm:$0xff] %vm405, %v446
      %455 = vst.msk [vmem:[#allocation3 + $0x8] sm:$0xff] %vm405, %v447
      %456 = vst.msk [vmem:[#allocation3 + $0x10] sm:$0xff] %vm405, %v448
      %457 = vst.msk [vmem:[#allocation3 + $0x18] sm:$0xff] %vm405, %v449
      %458 = vst.msk [vmem:[#allocation3 + $0x20] sm:$0xff] %vm405, %v450
      %459 = vst.msk [vmem:[#allocation3 + $0x28] sm:$0xff] %vm405, %v451
      %460 = vst.msk [vmem:[#allocation3 + $0x30] sm:$0xff] %vm405, %v452
      %461 = vst.msk [vmem:[#allocation3 + $0x38] sm:$0xff] %vm405, %v453
      // Predicated region
      $region33: #{sample_loss_forward.1} parent=27 // pred_check
        %p462 = pneg %p220
      $region34: #{sample_loss_forward.1} parent=27 // pred_check_branch
        %464 = sbr.rel (%p462) target = $region36
      $region35: #{sample_loss_forward.1} parent=27 // pred_region
        %v465 = vld [vmem:[#allocation2] sm:$0xff]
        %v466 = vld [vmem:[#allocation2 + $0x8] sm:$0xff]
        %v467 = vld [vmem:[#allocation2 + $0x10] sm:$0xff]
        %v468 = vld [vmem:[#allocation2 + $0x18] sm:$0xff]
        %v469 = vld [vmem:[#allocation2 + $0x20] sm:$0xff]
        %v470 = vld [vmem:[#allocation2 + $0x28] sm:$0xff]
        %v471 = vld [vmem:[#allocation2 + $0x30] sm:$0xff]
        %v472 = vld [vmem:[#allocation2 + $0x38] sm:$0xff]
        %v473 = vld [vmem:[#allocation3] sm:$0xff]
        %v474 = vld [vmem:[#allocation3 + $0x8] sm:$0xff]
        %v475 = vld [vmem:[#allocation3 + $0x10] sm:$0xff]
        %v476 = vld [vmem:[#allocation3 + $0x18] sm:$0xff]
        %v477 = vld [vmem:[#allocation3 + $0x20] sm:$0xff]
        %v478 = vld [vmem:[#allocation3 + $0x28] sm:$0xff]
        %v479 = vld [vmem:[#allocation3 + $0x30] sm:$0xff]
        %v480 = vld [vmem:[#allocation3 + $0x38] sm:$0xff]
        %vm481 = vcmp.ne.f32.partialorder %v465, 0.0
        %vm482 = vcmp.ne.f32.partialorder %v466, 0.0
        %vm483 = vcmp.ne.f32.partialorder %v467, 0.0
        %vm484 = vcmp.ne.f32.partialorder %v468, 0.0
        %vm485 = vcmp.ne.f32.partialorder %v469, 0.0
        %vm486 = vcmp.ne.f32.partialorder %v470, 0.0
        %vm487 = vcmp.ne.f32.partialorder %v471, 0.0
        %vm488 = vcmp.ne.f32.partialorder %v472, 0.0
        %vm489 = vcmp.ne.f32.partialorder %v473, 0.0
        %vm490 = vcmp.ne.f32.partialorder %v474, 0.0
        %vm491 = vcmp.ne.f32.partialorder %v475, 0.0
        %vm492 = vcmp.ne.f32.partialorder %v476, 0.0
        %vm493 = vcmp.ne.f32.partialorder %v477, 0.0
        %vm494 = vcmp.ne.f32.partialorder %v478, 0.0
        %vm495 = vcmp.ne.f32.partialorder %v479, 0.0
        %vm496 = vcmp.ne.f32.partialorder %v480, 0.0
        %vm497 = vmand %vm481, %vm489
        %vm498 = vmand %vm482, %vm490
        %vm499 = vmand %vm483, %vm491
        %vm500 = vmand %vm484, %vm492
        %vm501 = vmand %vm485, %vm493
        %vm502 = vmand %vm486, %vm494
        %vm503 = vmand %vm487, %vm495
        %vm504 = vmand %vm488, %vm496
        %vm505 = vcmp.eq.f32.partialorder %v465, 0.0
        %vm506 = vcmp.eq.f32.partialorder %v466, 0.0
        %vm507 = vcmp.eq.f32.partialorder %v467, 0.0
        %vm508 = vcmp.eq.f32.partialorder %v468, 0.0
        %vm509 = vcmp.eq.f32.partialorder %v469, 0.0
        %vm510 = vcmp.eq.f32.partialorder %v470, 0.0
        %vm511 = vcmp.eq.f32.partialorder %v471, 0.0
        %vm512 = vcmp.eq.f32.partialorder %v472, 0.0
        %v513 = vsel %vm505, 1.0, %v465
        %v514 = vsel %vm506, 1.0, %v466
        %v515 = vsel %vm507, 1.0, %v467
        %v516 = vsel %vm508, 1.0, %v468
        %v517 = vsel %vm509, 1.0, %v469
        %v518 = vsel %vm510, 1.0, %v470
        %v519 = vsel %vm511, 1.0, %v471
        %v520 = vsel %vm512, 1.0, %v472
        %v521 = vrcp.pop %v513
        %v522 = vrcp.pop %v514
        %v523 = vrcp.pop %v515
        %v524 = vrcp.pop %v516
        %v525 = vrcp.pop %v517
        %v526 = vrcp.pop %v518
        %v527 = vrcp.pop %v519
        %v528 = vrcp.pop %v520
        %v529 = vmul.f32 %v473, %v521
        %v530 = vmul.f32 %v474, %v522
        %v531 = vmul.f32 %v475, %v523
        %v532 = vmul.f32 %v476, %v524
        %v533 = vmul.f32 %v477, %v525
        %v534 = vmul.f32 %v478, %v526
        %v535 = vmul.f32 %v479, %v527
        %v536 = vmul.f32 %v480, %v528
        %v537 = vsel %vm497, %v529, 1.0
        %v538 = vsel %vm498, %v530, 1.0
        %v539 = vsel %vm499, %v531, 1.0
        %v540 = vsel %vm500, %v532, 1.0
        %v541 = vsel %vm501, %v533, 1.0
        %v542 = vsel %vm502, %v534, 1.0
        %v543 = vsel %vm503, %v535, 1.0
        %v544 = vsel %vm504, %v536, 1.0
        %v545 = vlog2.pop %v537
        %v546 = vmul.f32 %v545, 0.6931472
        %v547 = vlog2.pop %v538
        %v548 = vmul.f32 %v547, 0.6931472
        %v549 = vlog2.pop %v539
        %v550 = vmul.f32 %v549, 0.6931472
        %v551 = vlog2.pop %v540
        %v552 = vmul.f32 %v551, 0.6931472
        %v553 = vlog2.pop %v541
        %v554 = vmul.f32 %v553, 0.6931472
        %v555 = vlog2.pop %v542
        %v556 = vmul.f32 %v555, 0.6931472
        %v557 = vlog2.pop %v543
        %v558 = vmul.f32 %v557, 0.6931472
        %v559 = vlog2.pop %v544
        %v560 = vmul.f32 %v559, 0.6931472
        %v561 = vadd.f32 %v546, 0.0
        %v562 = vadd.f32 %v548, 0.0
        %v563 = vadd.f32 %v550, 0.0
        %v564 = vadd.f32 %v552, 0.0
        %v565 = vadd.f32 %v554, 0.0
        %v566 = vadd.f32 %v556, 0.0
        %v567 = vadd.f32 %v558, 0.0
        %v568 = vadd.f32 %v560, 0.0
        %s569 = sld [smem:[#allocation5]]
        %p570 = scmp.lt.s32.totalorder %s569, 80
        %v571 = vmul.f32 %v561, %v561
        %v572 = vmul.f32 %v562, %v562
        %v573 = vmul.f32 %v563, %v563
        %v574 = vmul.f32 %v564, %v564
        %v575 = vmul.f32 %v565, %v565
        %v576 = vmul.f32 %v566, %v566
        %v577 = vmul.f32 %v567, %v567
        %v578 = vmul.f32 %v568, %v568
        %v579 = vsub.f32 0.0, %v561
        %v580 = vsub.f32 0.0, %v562
        %v581 = vsub.f32 0.0, %v563
        %v582 = vsub.f32 0.0, %v564
        %v583 = vsub.f32 0.0, %v565
        %v584 = vsub.f32 0.0, %v566
        %v585 = vsub.f32 0.0, %v567
        %v586 = vsub.f32 0.0, %v568
        %s587 = scalar_select %p570, 1, 0
        %v588 = vstv %s587
        %vm589 = vcmp.eq.s32.totalorder %v588, 1
        %v590 = vsel %vm589, %v571, %v579
        %v591 = vsel %vm589, %v572, %v580
        %v592 = vsel %vm589, %v573, %v581
        %v593 = vsel %vm589, %v574, %v582
        %v594 = vsel %vm589, %v575, %v583
        %v595 = vsel %vm589, %v576, %v584
        %v596 = vsel %vm589, %v577, %v585
        %v597 = vsel %vm589, %v578, %v586
        %v598 = vsel %vm497, %v590, 0.0
        %v599 = vsel %vm498, %v591, 0.0
        %v600 = vsel %vm499, %v592, 0.0
        %v601 = vsel %vm500, %v593, 0.0
        %v602 = vsel %vm501, %v594, 0.0
        %v603 = vsel %vm502, %v595, 0.0
        %v604 = vsel %vm503, %v596, 0.0
        %v605 = vsel %vm504, %v597, 0.0
        %v606 = vsub.f32 %v598, 0.01
        %v607 = vsub.f32 %v599, 0.01
        %v608 = vsub.f32 %v600, 0.01
        %v609 = vsub.f32 %v601, 0.01
        %v610 = vsub.f32 %v602, 0.01
        %v611 = vsub.f32 %v603, 0.01
        %v612 = vsub.f32 %v604, 0.01
        %v613 = vsub.f32 %v605, 0.01
        %v614 = vmax.f32 %v606, 0.0
        %v615 = vmax.f32 %v607, 0.0
        %v616 = vmax.f32 %v608, 0.0
        %v617 = vmax.f32 %v609, 0.0
        %v618 = vmax.f32 %v610, 0.0
        %v619 = vmax.f32 %v611, 0.0
        %v620 = vmax.f32 %v612, 0.0
        %v621 = vmax.f32 %v613, 0.0
        %v622 = vsel %vm405, %v614, 0.0
        %v623 = vsel %vm405, %v615, 0.0
        %v624 = vadd.f32 %v622, %v623
        %v625 = vsel %vm405, %v616, 0.0
        %v626 = vadd.f32 %v624, %v625
        %v627 = vsel %vm405, %v617, 0.0
        %v628 = vadd.f32 %v626, %v627
        %v629 = vsel %vm405, %v618, 0.0
        %v630 = vadd.f32 %v628, %v629
        %v631 = vsel %vm405, %v619, 0.0
        %v632 = vadd.f32 %v630, %v631
        %v633 = vsel %vm405, %v620, 0.0
        %v634 = vadd.f32 %v632, %v633
        %v635 = vsel %vm405, %v621, 0.0
        %v636 = vadd.f32 %v634, %v635
        %637 = vadd.xlane.f32.xlu0 %v636
        %v638 = vpop.xlane.xlu0 %637
        %v639 = vrot.slane %v638, 4
        %v640 = vadd.f32 %v638, %v639
        %v641 = vrot.slane %v640, 2
        %v642 = vadd.f32 %v640, %v641
        %v643 = vrot.slane %v642, 1
        %v644 = vadd.f32 %v642, %v643
        %s645 = vtos %v644
        %v646 = vstv %s645
        %647 = vst [vmem:[%s217] sm:$0xff] %v646
      $region36: #{sample_loss_forward.1} parent=27 // pred_fallthru
        _
      %p648 = scmp.lt.s32.totalorder %s19, 1
      %s649 = scalar_select %p648, %s19, 1
      %s650 = smul.addr %s649, 8
      %s651 = scalar_lea.vmem %s3, %s650
      // Predicated region
      $region37: #{sample_loss_forward.1} parent=27 // pred_check
        %p652 = pneg %p101
      $region38: #{sample_loss_forward.1} parent=27 // pred_check_branch
        %654 = sbr.rel (%p652) target = $region40
      $region39: #{sample_loss_forward.1} parent=27 // pred_region
        _
      $region40: #{sample_loss_forward.1} parent=27 // pred_fallthru
        _
    $region28: #{sample_loss_forward.1} parent=5 // pred_fallthru
      _
    %p655 = scmp.le.s32.totalorder 2, %s10
    // Predicated region
    $region41: #{sample_loss_forward.1} parent=5 // pred_check
      %p656 = pneg %p655
    $region42: #{sample_loss_forward.1} parent=5 // pred_check_branch
      %658 = sbr.rel (%p656) target = $region44
    $region43: #{sample_loss_forward.1} parent=5 // pred_region
      %s659 = ssub.s32 %s10, 2
      // Predicated region
      $region45: #{sample_loss_forward.1} parent=43 // pred_check
        %p660 = pneg %p107
      $region46: #{sample_loss_forward.1} parent=43 // pred_check_branch
        %662 = sbr.rel (%p660) target = $region48
      $region47: #{sample_loss_forward.1} parent=43 // pred_region
        %p663 = scmp.lt.s32.totalorder %s21, 1
        %s664 = scalar_select %p663, %s21, 1
        %s665 = smul.addr %s664, 8
        %s666 = scalar_lea.vmem %s3, %s665
      $region48: #{sample_loss_forward.1} parent=43 // pred_fallthru
        _
    $region44: #{sample_loss_forward.1} parent=5 // pred_fallthru
      _
  $region6: #{sample_loss_forward.1} parent=0 // loop_footer
    %s14 = sadd.s32 1, %s10
  $region7: #{sample_loss_forward.1} parent=0 // loop_footer_branch
    %9 = sbr.rel target = $region3
  $region8: #{sample_loss_forward.1} parent=0 // loop_exit
    _

</llo_original>
